<compile_context>
chip_gen: v6e
topology: v6e:2x2x1
jax: 0.10.0
libtpu: 0.0.40
codegen_flags: <defaults>
</compile_context>

<pallas_src>
import functools

import jax
import jax.numpy as jnp
import numpy as np
from jax import lax
from jax.experimental import pallas as pl
from jax.experimental.pallas import tpu as pltpu


def _nt_xent_kernel(emb_i_hbm, emb_j_hbm, out_ref,
                    zi_ref, zj_ref, acc_top_ref, acc_bot_ref, pos_ref,
                    *, batch_size, feature_dim, tile_k, temperature,
                    mxu_dtype, exp_dtype, in_dtype):
    kt = pl.program_id(0)
    nk = pl.num_programs(0)
    # Static constants (f32 semantics via numpy, no in-kernel scalar work).
    inv_t = np.float32(1.0 / temperature)
    scale = jnp.float32(np.sqrt(inv_t))            # rows scaled by sqrt(1/T)
    self_exp = jnp.float32(np.exp(inv_t))          # exp(sim(x,x)/T) for unit-norm rows
    eps = jnp.float32(1e-12)                       # F.normalize eps

    # --- first key tile: DMA inputs, normalize, cast, pos term, zero accumulators ----
    @pl.when(kt == 0)
    def _init():
        def _load_normalize(raw_i, raw_j, sem):
            ci = pltpu.make_async_copy(emb_i_hbm, raw_i, sem.at[0])
            cj = pltpu.make_async_copy(emb_j_hbm, raw_j, sem.at[1])
            ci.start(); cj.start()
            ci.wait(); cj.wait()
            xi = raw_i[...].astype(jnp.float32)
            xj = raw_j[...].astype(jnp.float32)
            # x / max(||x||, eps) == x * rsqrt(max(||x||^2, eps^2)); rsqrt on the EUP.
            inv_ni = lax.rsqrt(
                jnp.maximum(jnp.sum(xi * xi, axis=1, keepdims=True), eps * eps)) * scale
            inv_nj = lax.rsqrt(
                jnp.maximum(jnp.sum(xj * xj, axis=1, keepdims=True), eps * eps)) * scale
            zi = xi * inv_ni                       # f32, rows have norm sqrt(1/T)
            zj = xj * inv_nj
            # Positive term computed once, in f32, from the freshly normalized values:
            # sum_k sim(z_i[k], z_j[k]) / T  (1/T already folded via the scale).
            pos_ref[...] = jnp.sum(zi * zj).reshape(1, 1)
            zi_ref[...] = zi.astype(mxu_dtype)
            zj_ref[...] = zj.astype(mxu_dtype)

        # Staging buffers live only for this scope -> their VMEM is reused afterwards.
        pl.run_scoped(_load_normalize,
                      pltpu.VMEM((batch_size, feature_dim), in_dtype),
                      pltpu.VMEM((batch_size, feature_dim), in_dtype),
                      pltpu.SemaphoreType.DMA((2,)))
        acc_top_ref[...] = jnp.zeros_like(acc_top_ref)
        acc_bot_ref[...] = jnp.zeros_like(acc_bot_ref)

    # --- per-key-tile similarity blocks ----------------------------------------------
    qi = zi_ref[...]                               # [B, D] mxu_dtype (all queries resident)
    qj = zj_ref[...]
    start = pl.multiple_of(kt * tile_k, tile_k)
    ki = zi_ref[pl.ds(start, tile_k), :]           # [TK, D] current key tile
    kj = zj_ref[pl.ds(start, tile_k), :]

    # NT matmuls: contract the feature dim of both operands (no explicit transpose).
    dn = (((1,), (1,)), ((), ()))
    s_ii = lax.dot_general(qi, ki, dn, preferred_element_type=jnp.float32)   # [B,TK] = sim/T
    s_ij = lax.dot_general(qi, kj, dn, preferred_element_type=jnp.float32)
    s_jj = lax.dot_general(qj, kj, dn, preferred_element_type=jnp.float32)
    # s_ji is never formed: bottom-half row sums == column sums of exp(s_ij)/exp(s_jj).

    e_ii = jnp.exp(s_ii.astype(exp_dtype))
    e_ij = jnp.exp(s_ij.astype(exp_dtype))
    e_jj = jnp.exp(s_jj.astype(exp_dtype))

    # Top rows (queries = z_i): accumulate row sums across key tiles.
    acc_top_ref[...] += jnp.sum((e_ii + e_ij).astype(jnp.float32), axis=1, keepdims=True)

    # Bottom rows (queries = z_j): each key tile owns a disjoint set of z_j rows whose
    # denominators are complete column sums over the full resident query axis, so the
    # log folds straight into a scalar running sum.
    denom_bot = jnp.sum((e_ij + e_jj).astype(jnp.float32), axis=0, keepdims=True) - self_exp
    acc_bot_ref[...] += jnp.sum(jnp.log(denom_bot))

    @pl.when(kt == nk - 1)
    def _finalize():
        denom_top = acc_top_ref[...] - self_exp                                # [B, 1]
        loss_sum = (jnp.sum(jnp.log(denom_top))
                    + acc_bot_ref[...]
                    - jnp.float32(2.0) * pos_ref[...])                         # (1, 1)
        out_ref[...] = loss_sum * jnp.float32(1.0 / (2 * batch_size))


def _device_kind():
    try:
        return jax.devices()[0].device_kind.lower()
    except Exception:
        return ""


def _resolve_mxu_dtype(mxu_dtype, in_dtype):
    if mxu_dtype is not None:
        return mxu_dtype
    if jnp.dtype(in_dtype) == jnp.dtype(jnp.bfloat16):
        return jnp.bfloat16
    # v5e's MXU is far faster with bf16 operands; the f32 accumulation is kept either way.
    kind = _device_kind()
    if "v5" in kind and ("lite" in kind or "5e" in kind):
        return jnp.bfloat16
    return jnp.float32


def _resolve_exp_dtype(exp_dtype, mxu_dtype):
    if exp_dtype is not None:
        return exp_dtype
    if jnp.dtype(mxu_dtype) == jnp.dtype(jnp.bfloat16):
        kind = _device_kind()
        # bf16 EUP exists on v6e/v7x; keep f32 exp on older parts.
        if not any(v in kind for v in ("v2", "v3", "v4", "v5")):
            return jnp.bfloat16
    return jnp.float32


def _pick_key_tile(batch_size, dim, in_itemsize, mxu_itemsize, key_tile):
    try:
        cap = int(pltpu.get_tpu_info().vmem_capacity_bytes)
    except Exception:
        cap = 64 << 20                      # conservative: v7x per-core VMEM
    budget = max(cap - (8 << 20), 16 << 20)

    resident = 2 * batch_size * dim * mxu_itemsize          # zi/zj scratch (whole grid)
    staging = 2 * batch_size * dim * in_itemsize            # init-only (run_scoped, freed)

    def footprint(tk):
        # ~6-8 live [B, tk] f32 sim/exp temporaries per step + small accumulators.
        return resident + max(staging, 8 * batch_size * tk * 4) + 4 * (batch_size + 256) * 4

    cands = sorted({t for t in (key_tile, 512, 256, 128, batch_size)
                    if 0 < t <= batch_size and batch_size % t == 0}, reverse=True)
    tk = cands[-1]                          # smallest divisor as a fallback
    for t in cands:
        if footprint(t) <= budget:
            tk = t
            break
    vmem_limit = int(min(max(footprint(tk) * 5 // 4 + (4 << 20), 16 << 20), cap - (2 << 20)))
    return tk, vmem_limit


def contrastive_loss(emb_i, emb_j, temperature=0.5, *, key_tile=512,
                     mxu_dtype=None, exp_dtype=None):
    """Pallas TPU implementation of ContrastiveLoss.forward. Returns a scalar f32."""
    assert emb_i.shape == emb_j.shape and emb_i.ndim == 2
    assert emb_i.dtype == emb_j.dtype
    batch_size, dim = emb_i.shape
    in_dtype = emb_i.dtype

    mxu_dtype = _resolve_mxu_dtype(mxu_dtype, in_dtype)
    exp_dtype = _resolve_exp_dtype(exp_dtype, mxu_dtype)

    tk, vmem_limit = _pick_key_tile(batch_size, dim,
                                    jnp.dtype(in_dtype).itemsize,
                                    jnp.dtype(mxu_dtype).itemsize,
                                    key_tile)
    nk = batch_size // tk

    kernel = functools.partial(
        _nt_xent_kernel,
        batch_size=batch_size,
        feature_dim=dim,
        tile_k=tk,
        temperature=float(temperature),
        mxu_dtype=mxu_dtype,
        exp_dtype=exp_dtype,
        in_dtype=in_dtype,
    )
    out = pl.pallas_call(
        kernel,
        out_shape=jax.ShapeDtypeStruct((1, 1), jnp.float32),
        grid_spec=pltpu.PrefetchScalarGridSpec(
            num_scalar_prefetch=0,
            grid=(nk,),
            in_specs=[
                pl.BlockSpec(memory_space=pl.ANY),   # raw HBM refs; DMA'd once at kt==0
                pl.BlockSpec(memory_space=pl.ANY),
            ],
            out_specs=pl.BlockSpec((1, 1), lambda k: (0, 0)),
            scratch_shapes=[
                pltpu.VMEM((batch_size, dim), mxu_dtype),   # normalized z_i (resident)
                pltpu.VMEM((batch_size, dim), mxu_dtype),   # normalized z_j (resident)
                pltpu.VMEM((batch_size, 1), jnp.float32),   # top-row denominator sums
                pltpu.VMEM((1, 1), jnp.float32),            # bottom-row sum of logs
                pltpu.VMEM((1, 1), jnp.float32),            # positive-pair term (sum sim/T)
            ],
        ),
        compiler_params=pltpu.CompilerParams(
            dimension_semantics=("arbitrary",),   # key axis is a reduction
            vmem_limit_bytes=vmem_limit,
        ),
    )(emb_i, emb_j)
    return out[0, 0]


def _reference_loss(emb_i, emb_j, temperature=0.5):
    """Pure-JAX reference mirroring the PyTorch module, for a sanity check."""
    b = emb_i.shape[0]
    zi = emb_i / jnp.maximum(jnp.linalg.norm(emb_i, axis=1, keepdims=True), 1e-12)
    zj = emb_j / jnp.maximum(jnp.linalg.norm(emb_j, axis=1, keepdims=True), 1e-12)
    rep = jnp.concatenate([zi, zj], axis=0)
    sim = rep @ rep.T
    pos = jnp.concatenate([jnp.diagonal(sim, offset=b), jnp.diagonal(sim, offset=-b)])
    neg_mask = 1.0 - jnp.eye(2 * b)
    nom = jnp.exp(pos / temperature)
    den = jnp.sum(neg_mask * jnp.exp(sim / temperature), axis=1)
    return jnp.sum(-jnp.log(nom / den)) / (2 * b)


if __name__ == "__main__":
    # Deterministic setup consistent with the module: temperature = 0.5, batch_size = 4.
    batch_size, hidden = 4, 32
    temperature = 0.5

    key = jax.random.PRNGKey(0)
    k_i, k_j = jax.random.split(key)
    emb_i = jax.random.normal(k_i, (batch_size, hidden), dtype=jnp.float32)
    emb_j = jax.random.normal(k_j, (batch_size, hidden), dtype=jnp.float32)

    ref = jax.block_until_ready(_reference_loss(emb_i, emb_j, temperature))

    # f32 MXU path: matches the PyTorch/JAX reference to tight tolerance.
    loss = jax.block_until_ready(
        contrastive_loss(emb_i, emb_j, temperature=temperature, mxu_dtype=jnp.float32))
    assert jnp.isfinite(loss), "kernel produced non-finite loss"
    assert jnp.allclose(loss, ref, atol=1e-4, rtol=1e-4), (loss, ref)

    # bf16 MXU operands (f32 accumulation) + bf16 exp where the EUP supports it;
    # validated at a looser tolerance since operand precision drops to ~1e-3.
    loss_bf16 = jax.block_until_ready(
        contrastive_loss(emb_i, emb_j, temperature=temperature, mxu_dtype=jnp.bfloat16))
    assert jnp.isfinite(loss_bf16), "bf16 kernel produced non-finite loss"
    assert jnp.allclose(loss_bf16, ref, atol=5e-2, rtol=5e-2), (loss_bf16, ref)

    print("KERNEL_OK")
</pallas_src>

<mosaic_0001>
module attributes {stable_mosaic.version = 11 : i64} {
  func.func @_nt_xent_kernel(%arg0: i32, %arg1: memref<4x32xf32, #tpu.memory_space<any>>, %arg2: memref<4x32xf32, #tpu.memory_space<any>>, %arg3: memref<1x1xf32, #tpu.memory_space<vmem>>, %arg4: memref<4x32xf32, #tpu.memory_space<vmem>>, %arg5: memref<4x32xf32, #tpu.memory_space<vmem>>, %arg6: memref<4x1xf32, #tpu.memory_space<vmem>>, %arg7: memref<1x1xf32, #tpu.memory_space<vmem>>, %arg8: memref<1x1xf32, #tpu.memory_space<vmem>>) attributes {dimension_semantics = [#tpu.dimension_semantics<arbitrary>], iteration_bounds = array<i64: 1>, scalar_prefetch = 0 : i64, scratch_operands = 5 : i64, tpu.core_type = #tpu.core_type<tc>, window_params = [{}, {}, {pipeline_mode = #tpu.pipeline_mode<synchronous>, transform_indices = @transform_2, window_bounds = array<i64: 1, 1>}]} {
    %c0_i32 = arith.constant 0 : i32
    %0 = arith.cmpi eq, %arg0, %c0_i32 : i32
    %1 = arith.extui %0 : i1 to i32
    %cst = arith.constant 9.99999996E-13 : f32
    %cst_0 = arith.constant 1.41421354 : f32
    %c0_i32_1 = arith.constant 0 : i32
    %2 = arith.cmpi ne, %1, %c0_i32_1 : i32
    scf.if %2 {
      "tpu.region"() ({
        %alloca = memref.alloca() : memref<4x32xf32, #tpu.memory_space<vmem>>
        %alloca_31 = memref.alloca() : memref<4x32xf32, #tpu.memory_space<vmem>>
        %44 = tpu.sem_alloc : memref<2x!tpu.dma_semaphore, #tpu.memory_space<semaphore_mem>>
        %c0_i32_32 = arith.constant 0 : i32
        %45 = tpu.memref_slice %44[%c0_i32_32] : memref<2x!tpu.dma_semaphore, #tpu.memory_space<semaphore_mem>> -> memref<1x!tpu.dma_semaphore, #tpu.memory_space<semaphore_mem>>
        %46 = tpu.memref_squeeze %45 : memref<1x!tpu.dma_semaphore, #tpu.memory_space<semaphore_mem>> -> memref<!tpu.dma_semaphore, #tpu.memory_space<semaphore_mem>>
        tpu.enqueue_dma source(%arg1 : memref<4x32xf32, #tpu.memory_space<any>>) target(%alloca : memref<4x32xf32, #tpu.memory_space<vmem>>) target_semaphore(%46 : memref<!tpu.dma_semaphore, #tpu.memory_space<semaphore_mem>>)
        %c1_i32 = arith.constant 1 : i32
        %47 = tpu.memref_slice %44[%c1_i32] : memref<2x!tpu.dma_semaphore, #tpu.memory_space<semaphore_mem>> -> memref<1x!tpu.dma_semaphore, #tpu.memory_space<semaphore_mem>>
        %48 = tpu.memref_squeeze %47 : memref<1x!tpu.dma_semaphore, #tpu.memory_space<semaphore_mem>> -> memref<!tpu.dma_semaphore, #tpu.memory_space<semaphore_mem>>
        tpu.enqueue_dma source(%arg2 : memref<4x32xf32, #tpu.memory_space<any>>) target(%alloca_31 : memref<4x32xf32, #tpu.memory_space<vmem>>) target_semaphore(%48 : memref<!tpu.dma_semaphore, #tpu.memory_space<semaphore_mem>>)
        %c0_i32_33 = arith.constant 0 : i32
        %49 = tpu.memref_slice %44[%c0_i32_33] : memref<2x!tpu.dma_semaphore, #tpu.memory_space<semaphore_mem>> -> memref<1x!tpu.dma_semaphore, #tpu.memory_space<semaphore_mem>>
        %50 = tpu.memref_squeeze %49 : memref<1x!tpu.dma_semaphore, #tpu.memory_space<semaphore_mem>> -> memref<!tpu.dma_semaphore, #tpu.memory_space<semaphore_mem>>
        tpu.wait_dma2 semaphore(%50 : memref<!tpu.dma_semaphore, #tpu.memory_space<semaphore_mem>>) src(%arg1 : memref<4x32xf32, #tpu.memory_space<any>>) dst(%alloca : memref<4x32xf32, #tpu.memory_space<vmem>>)
        %c1_i32_34 = arith.constant 1 : i32
        %51 = tpu.memref_slice %44[%c1_i32_34] : memref<2x!tpu.dma_semaphore, #tpu.memory_space<semaphore_mem>> -> memref<1x!tpu.dma_semaphore, #tpu.memory_space<semaphore_mem>>
        %52 = tpu.memref_squeeze %51 : memref<1x!tpu.dma_semaphore, #tpu.memory_space<semaphore_mem>> -> memref<!tpu.dma_semaphore, #tpu.memory_space<semaphore_mem>>
        tpu.wait_dma2 semaphore(%52 : memref<!tpu.dma_semaphore, #tpu.memory_space<semaphore_mem>>) src(%arg2 : memref<4x32xf32, #tpu.memory_space<any>>) dst(%alloca_31 : memref<4x32xf32, #tpu.memory_space<vmem>>)
        %c0_35 = arith.constant 0 : index
        %c0_36 = arith.constant 0 : index
        %53 = vector.load %alloca[%c0_35, %c0_36] : memref<4x32xf32, #tpu.memory_space<vmem>>, vector<4x32xf32>
        %c0_37 = arith.constant 0 : index
        %c0_38 = arith.constant 0 : index
        %54 = vector.load %alloca_31[%c0_37, %c0_38] : memref<4x32xf32, #tpu.memory_space<vmem>>, vector<4x32xf32>
        %55 = arith.mulf %53, %53 : vector<4x32xf32>
        %cst_39 = arith.constant dense<0.000000e+00> : vector<4xf32>
        %56 = vector.multi_reduction <add>, %55, %cst_39 [1] : vector<4x32xf32> to vector<4xf32>
        %57 = vector.shape_cast %56 : vector<4xf32> to vector<4x1xf32>
        %58 = arith.mulf %cst, %cst : f32
        %59 = vector.broadcast %58 : f32 to vector<4x1xf32>
        %60 = arith.maximumf %57, %59 : vector<4x1xf32>
        %61 = math.rsqrt %60 : vector<4x1xf32>
        %62 = vector.broadcast %cst_0 : f32 to vector<4x1xf32>
        %63 = arith.mulf %61, %62 : vector<4x1xf32>
        %64 = arith.mulf %54, %54 : vector<4x32xf32>
        %cst_40 = arith.constant dense<0.000000e+00> : vector<4xf32>
        %65 = vector.multi_reduction <add>, %64, %cst_40 [1] : vector<4x32xf32> to vector<4xf32>
        %66 = vector.shape_cast %65 : vector<4xf32> to vector<4x1xf32>
        %67 = arith.mulf %cst, %cst : f32
        %68 = vector.broadcast %67 : f32 to vector<4x1xf32>
        %69 = arith.maximumf %66, %68 : vector<4x1xf32>
        %70 = math.rsqrt %69 : vector<4x1xf32>
        %71 = vector.broadcast %cst_0 : f32 to vector<4x1xf32>
        %72 = arith.mulf %70, %71 : vector<4x1xf32>
        %73 = vector.broadcast %63 : vector<4x1xf32> to vector<4x32xf32>
        %74 = arith.mulf %53, %73 : vector<4x32xf32>
        %75 = vector.broadcast %72 : vector<4x1xf32> to vector<4x32xf32>
        %76 = arith.mulf %54, %75 : vector<4x32xf32>
        %77 = arith.mulf %74, %76 : vector<4x32xf32>
        %78 = vector.shape_cast %77 : vector<4x32xf32> to vector<1x4x32xf32>
        %cst_41 = arith.constant dense<0.000000e+00> : vector<1xf32>
        %79 = vector.multi_reduction <add>, %78, %cst_41 [1, 2] : vector<1x4x32xf32> to vector<1xf32>
        %80 = vector.shape_cast %79 : vector<1xf32> to vector<1x1x1xf32>
        %81 = vector.extract %80[0, 0, 0] : f32 from vector<1x1x1xf32>
        %82 = vector.broadcast %81 : f32 to vector<1x1xf32>
        %c0_42 = arith.constant 0 : index
        %c0_43 = arith.constant 0 : index
        %83 = vector.load %arg8[%c0_42, %c0_43] : memref<1x1xf32, #tpu.memory_space<vmem>>, vector<1x1xf32>
        tpu.vector_store %arg8[%c0_42, %c0_43], %82 {strides = array<i32>} : memref<1x1xf32, #tpu.memory_space<vmem>>, vector<1x1xf32>,
        %c0_44 = arith.constant 0 : index
        %c0_45 = arith.constant 0 : index
        %84 = vector.load %arg4[%c0_44, %c0_45] : memref<4x32xf32, #tpu.memory_space<vmem>>, vector<4x32xf32>
        tpu.vector_store %arg4[%c0_44, %c0_45], %74 {strides = array<i32>} : memref<4x32xf32, #tpu.memory_space<vmem>>, vector<4x32xf32>,
        %c0_46 = arith.constant 0 : index
        %c0_47 = arith.constant 0 : index
        %85 = vector.load %arg5[%c0_46, %c0_47] : memref<4x32xf32, #tpu.memory_space<vmem>>, vector<4x32xf32>
        tpu.vector_store %arg5[%c0_46, %c0_47], %76 {strides = array<i32>} : memref<4x32xf32, #tpu.memory_space<vmem>>, vector<4x32xf32>,
        tpu.yield
      }) : () -> ()
      %cst_25 = arith.constant 0.000000e+00 : f32
      %40 = vector.broadcast %cst_25 : f32 to vector<4x1xf32>
      %c0_26 = arith.constant 0 : index
      %c0_27 = arith.constant 0 : index
      %41 = vector.load %arg6[%c0_26, %c0_27] : memref<4x1xf32, #tpu.memory_space<vmem>>, vector<4x1xf32>
      tpu.vector_store %arg6[%c0_26, %c0_27], %40 {strides = array<i32>} : memref<4x1xf32, #tpu.memory_space<vmem>>, vector<4x1xf32>,
      %cst_28 = arith.constant 0.000000e+00 : f32
      %42 = vector.broadcast %cst_28 : f32 to vector<1x1xf32>
      %c0_29 = arith.constant 0 : index
      %c0_30 = arith.constant 0 : index
      %43 = vector.load %arg7[%c0_29, %c0_30] : memref<1x1xf32, #tpu.memory_space<vmem>>, vector<1x1xf32>
      tpu.vector_store %arg7[%c0_29, %c0_30], %42 {strides = array<i32>} : memref<1x1xf32, #tpu.memory_space<vmem>>, vector<1x1xf32>,
    } else {
    }
    %c0 = arith.constant 0 : index
    %c0_2 = arith.constant 0 : index
    %3 = vector.load %arg4[%c0, %c0_2] : memref<4x32xf32, #tpu.memory_space<vmem>>, vector<4x32xf32>
    %c0_3 = arith.constant 0 : index
    %c0_4 = arith.constant 0 : index
    %4 = vector.load %arg5[%c0_3, %c0_4] : memref<4x32xf32, #tpu.memory_space<vmem>>, vector<4x32xf32>
    %c4_i32 = arith.constant 4 : i32
    %5 = arith.muli %arg0, %c4_i32 : i32
    %6 = tpu.assume_multiple %5, 4 : i32
    %7 = arith.index_cast %6 : i32 to index
    %c0_5 = arith.constant 0 : index
    %8 = vector.load %arg4[%7, %c0_5] : memref<4x32xf32, #tpu.memory_space<vmem>>, vector<4x32xf32>
    %9 = arith.index_cast %6 : i32 to index
    %c0_6 = arith.constant 0 : index
    %10 = vector.load %arg5[%9, %c0_6] : memref<4x32xf32, #tpu.memory_space<vmem>>, vector<4x32xf32>
    %cst_7 = arith.constant dense<0.000000e+00> : vector<4x4xf32>
    %11 = tpu.matmul %3, %8, %cst_7 {dimension_numbers = #tpu.dot_dimension_numbers<[1], [1], [0], [0], [0, 0, 1, 0], [], []>} : vector<4x32xf32>, vector<4x32xf32>, vector<4x4xf32> -> vector<4x4xf32>
    %cst_8 = arith.constant dense<0.000000e+00> : vector<4x4xf32>
    %12 = tpu.matmul %3, %10, %cst_8 {dimension_numbers = #tpu.dot_dimension_numbers<[1], [1], [0], [0], [0, 0, 1, 0], [], []>} : vector<4x32xf32>, vector<4x32xf32>, vector<4x4xf32> -> vector<4x4xf32>
    %cst_9 = arith.constant dense<0.000000e+00> : vector<4x4xf32>
    %13 = tpu.matmul %4, %10, %cst_9 {dimension_numbers = #tpu.dot_dimension_numbers<[1], [1], [0], [0], [0, 0, 1, 0], [], []>} : vector<4x32xf32>, vector<4x32xf32>, vector<4x4xf32> -> vector<4x4xf32>
    %14 = math.exp %11 : vector<4x4xf32>
    %15 = math.exp %12 : vector<4x4xf32>
    %16 = math.exp %13 : vector<4x4xf32>
    %c0_10 = arith.constant 0 : index
    %c0_11 = arith.constant 0 : index
    %17 = vector.load %arg6[%c0_10, %c0_11] : memref<4x1xf32, #tpu.memory_space<vmem>>, vector<4x1xf32>
    %18 = arith.addf %14, %15 : vector<4x4xf32>
    %cst_12 = arith.constant dense<0.000000e+00> : vector<4xf32>
    %19 = vector.multi_reduction <add>, %18, %cst_12 [1] : vector<4x4xf32> to vector<4xf32>
    %20 = vector.shape_cast %19 : vector<4xf32> to vector<4x1xf32>
    %21 = arith.addf %17, %20 : vector<4x1xf32>
    %c0_13 = arith.constant 0 : index
    %c0_14 = arith.constant 0 : index
    %22 = vector.load %arg6[%c0_13, %c0_14] : memref<4x1xf32, #tpu.memory_space<vmem>>, vector<4x1xf32>
    tpu.vector_store %arg6[%c0_13, %c0_14], %21 {strides = array<i32>} : memref<4x1xf32, #tpu.memory_space<vmem>>, vector<4x1xf32>,
    %23 = arith.addf %15, %16 : vector<4x4xf32>
    %cst_15 = arith.constant dense<0.000000e+00> : vector<4xf32>
    %24 = vector.multi_reduction <add>, %23, %cst_15 [0] : vector<4x4xf32> to vector<4xf32>
    %25 = vector.shape_cast %24 : vector<4xf32> to vector<1x4xf32>
    %cst_16 = arith.constant 7.38905573 : f32
    %26 = vector.broadcast %cst_16 : f32 to vector<1x4xf32>
    %27 = arith.subf %25, %26 : vector<1x4xf32>
    %c0_17 = arith.constant 0 : index
    %c0_18 = arith.constant 0 : index
    %28 = vector.load %arg7[%c0_17, %c0_18] : memref<1x1xf32, #tpu.memory_space<vmem>>, vector<1x1xf32>
    %29 = math.log %27 : vector<1x4xf32>
    %30 = vector.shape_cast %29 : vector<1x4xf32> to vector<1x1x4xf32>
    %cst_19 = arith.constant dense<0.000000e+00> : vector<1xf32>
    %31 = vector.multi_reduction <add>, %30, %cst_19 [1, 2] : vector<1x1x4xf32> to vector<1xf32>
    %32 = vector.shape_cast %31 : vector<1xf32> to vector<1x1x1xf32>
    %33 = vector.extract %32[0, 0, 0] : f32 from vector<1x1x1xf32>
    %34 = vector.broadcast %33 : f32 to vector<1x1xf32>
    %35 = arith.addf %28, %34 : vector<1x1xf32>
    %c0_20 = arith.constant 0 : index
    %c0_21 = arith.constant 0 : index
    %36 = vector.load %arg7[%c0_20, %c0_21] : memref<1x1xf32, #tpu.memory_space<vmem>>, vector<1x1xf32>
    tpu.vector_store %arg7[%c0_20, %c0_21], %35 {strides = array<i32>} : memref<1x1xf32, #tpu.memory_space<vmem>>, vector<1x1xf32>,
    %c0_i32_22 = arith.constant 0 : i32
    %37 = arith.cmpi eq, %arg0, %c0_i32_22 : i32
    %38 = arith.extui %37 : i1 to i32
    %cst_23 = arith.constant 7.38905573 : f32
    %c0_i32_24 = arith.constant 0 : i32
    %39 = arith.cmpi ne, %38, %c0_i32_24 : i32
    scf.if %39 {
      %c0_25 = arith.constant 0 : index
      %c0_26 = arith.constant 0 : index
      %40 = vector.load %arg6[%c0_25, %c0_26] : memref<4x1xf32, #tpu.memory_space<vmem>>, vector<4x1xf32>
      %41 = vector.broadcast %cst_23 : f32 to vector<4x1xf32>
      %42 = arith.subf %40, %41 : vector<4x1xf32>
      %43 = math.log %42 : vector<4x1xf32>
      %44 = vector.shape_cast %43 : vector<4x1xf32> to vector<1x4x1xf32>
      %cst_27 = arith.constant dense<0.000000e+00> : vector<1xf32>
      %45 = vector.multi_reduction <add>, %44, %cst_27 [1, 2] : vector<1x4x1xf32> to vector<1xf32>
      %46 = vector.shape_cast %45 : vector<1xf32> to vector<1x1x1xf32>
      %47 = vector.extract %46[0, 0, 0] : f32 from vector<1x1x1xf32>
      %c0_28 = arith.constant 0 : index
      %c0_29 = arith.constant 0 : index
      %48 = vector.load %arg7[%c0_28, %c0_29] : memref<1x1xf32, #tpu.memory_space<vmem>>, vector<1x1xf32>
      %49 = vector.broadcast %47 : f32 to vector<1x1xf32>
      %50 = arith.addf %49, %48 : vector<1x1xf32>
      %c0_30 = arith.constant 0 : index
      %c0_31 = arith.constant 0 : index
      %51 = vector.load %arg8[%c0_30, %c0_31] : memref<1x1xf32, #tpu.memory_space<vmem>>, vector<1x1xf32>
      %cst_32 = arith.constant 2.000000e+00 : f32
      %52 = vector.broadcast %cst_32 : f32 to vector<1x1xf32>
      %53 = arith.mulf %52, %51 : vector<1x1xf32>
      %54 = arith.subf %50, %53 : vector<1x1xf32>
      %cst_33 = arith.constant 1.250000e-01 : f32
      %55 = vector.broadcast %cst_33 : f32 to vector<1x1xf32>
      %56 = arith.mulf %54, %55 : vector<1x1xf32>
      %c0_34 = arith.constant 0 : index
      %c0_35 = arith.constant 0 : index
      %57 = vector.load %arg3[%c0_34, %c0_35] : memref<1x1xf32, #tpu.memory_space<vmem>>, vector<1x1xf32>
      tpu.vector_store %arg3[%c0_34, %c0_35], %56 {strides = array<i32>} : memref<1x1xf32, #tpu.memory_space<vmem>>, vector<1x1xf32>,
    } else {
    }
    return
  }
  func.func @transform_2(%arg0: i32) -> (i32, i32) {
    %c0_i32 = arith.constant 0 : i32
    %c0_i32_0 = arith.constant 0 : i32
    %c0_i32_1 = arith.constant 0 : i32
    return %c0_i32, %c0_i32_0 : i32, i32
  }
}

</mosaic_0001>

<llo_original>
// kernel: tpu_custom_call.1
$region0: #{tpu_custom_call.1}
  #allocation0 [shape = 'u32[]', space=smem, size = 0x4, offset = 0x4, fixed_abs, tag = 'smem constant byte address 0x4 - core index']
  #allocation1 [shape = 'u32[144,128]{1,0:T(1,128)}', space=vmem, size = 0x12000, scoped, tag = 'internal scratch']
  #allocation2 [shape = 'f32[4,32]{1,0:T(4,128)}', space=vmem, size = 0x800, scoped, tag = 'scratch operand']
  #allocation3 [shape = 'f32[4,32]{1,0:T(4,128)}', space=vmem, size = 0x800, scoped, tag = 'scratch operand']
  #allocation4 [shape = 'f32[4,1]{1,0:T(4,128)}', space=vmem, size = 0x800, scoped, tag = 'scratch operand']
  #allocation5 [shape = 'f32[1,1]{1,0:T(1,128)}', space=vmem, size = 0x200, scoped, tag = 'scratch operand']
  #allocation6 [shape = 'f32[1,1]{1,0:T(1,128)}', space=vmem, size = 0x200, scoped, tag = 'scratch operand']
  #allocation12 [shape = 's32[]', space=sflag, size = 0x4, offset = 0, fixed_abs, tag = 'sflag constant byte address 0x0 - dummy sync flag']
  #allocation13 [shape = 's32[]', space=sflag, size = 0x4, offset = 0, fixed_abs, tag = 'sflag constant byte address 0x0 - dummy sync flag']
  #allocation14 [shape = 'u32[]', space=smem, size = 0x4, offset = 0x44, fixed_abs, tag = 'smem constant byte address 0x44 - assertion arg 0']
  #allocation15 [shape = 'u32[]', space=smem, size = 0x4, offset = 0x48, fixed_abs, tag = 'smem constant byte address 0x48 - assertion arg 1']
  #allocation16 [shape = 's32[]', space=sflag, size = 0x4, offset = 0, fixed_abs, tag = 'sflag constant byte address 0x0 - dummy sync flag']
  #allocation17 [shape = 's32[]', space=sflag, size = 0x4, offset = 0, fixed_abs, tag = 'sflag constant byte address 0x0 - dummy sync flag']
  %s0 = inlined_call_operand.hbm [shape: f32[4,32], index: 0, kind: input, shape index: {}]
  %s1 = inlined_call_operand.hbm [shape: f32[4,32], index: 1, kind: input, shape index: {}]
  %s2 = inlined_call_operand.hbm [shape: f32[1,1], index: 2, kind: output, shape index: {}]
  %s3 = sld [smem:[#allocation0]]
  $region27: #{tpu_custom_call.1} parent=0
    _
  %s5 = ssub.s32 1, %s3
  %s6 = scalar_select 0, %s5, %s3
  $region1: #{tpu_custom_call.1} parent=0
    #allocation7 [shape = 'u8[512]{0}', space=vmem, size = 0x400, scoped, tag = 'output window, operand 0, single buffered']
    #allocation8 [shape = 's32[1]{0}', space=sflag, size = 0x4, scoped, tag = 'scoped memory for tpu_custom_call.1']
    %7 = vsyncpa [#allocation8], 0
    %p8 = scmp.eq.s32.totalorder 0, 0
    // Predicated region
    $region2: #{tpu_custom_call.1} parent=1 // pred_check
      %p9 = pneg %p8
    $region3: #{tpu_custom_call.1} parent=1 // pred_check_branch
      %11 = sbr.rel (%p9) target = $region5
    $region4: #{tpu_custom_call.1} parent=1 // pred_region
      $region6: #{tpu_custom_call.1} parent=4
        #allocation9 [shape = 'u8[2048]{0}', space=vmem, size = 0x800, scoped, tag = 'scoped memory for tpu_custom_call.1']
        #allocation10 [shape = 'u8[2048]{0}', space=vmem, size = 0x800, scoped, tag = 'scoped memory for tpu_custom_call.1']
        #allocation11 [shape = 's32[2]{0}', space=sflag, size = 0x8, scoped, tag = 'scoped memory for tpu_custom_call.1']
        // Predicated region
        $region7: #{tpu_custom_call.1} parent=6 // pred_check
          _
        $region8: #{tpu_custom_call.1} parent=6 // pred_check_branch
          %13 = sbr.rel target = $region10
        $region9: #{tpu_custom_call.1} parent=6 // pred_region
          %14 = sst [smem:[#allocation14]] [#allocation13]
          %15 = sst [smem:[#allocation15]] [#allocation12]
        $region10: #{tpu_custom_call.1} parent=6 // pred_fallthru
          _
        %17 = shalt.err (0)
        %s19 = sshll.u32 [#allocation9], 4
        %s20 = int_to_ptr.vmem [resolvable:$true] %s19
        %22 = dma.hbm_to_vmem [thread:$0]  %s0, 64, %s20, [#allocation11]
        %s23 = scalar_lea.sflag [#allocation11], 1
        // Predicated region
        $region11: #{tpu_custom_call.1} parent=6 // pred_check
          _
        $region12: #{tpu_custom_call.1} parent=6 // pred_check_branch
          %25 = sbr.rel target = $region14
        $region13: #{tpu_custom_call.1} parent=6 // pred_region
          %26 = sst [smem:[#allocation14]] [#allocation17]
          %27 = sst [smem:[#allocation15]] [#allocation16]
        $region14: #{tpu_custom_call.1} parent=6 // pred_fallthru
          _
        %29 = shalt.err (0)
        %s31 = sshll.u32 [#allocation10], 4
        %s32 = int_to_ptr.vmem [resolvable:$true] %s31
        %34 = dma.hbm_to_vmem [thread:$0]  %s1, 64, %s32, %s23
        %s35 = smul.u32 4, 1
        %s36 = sshll.u32 %s35, 4
        %37 = dma.done [#allocation11], %s36
        %s38 = sshll.u32 %s35, 4
        %39 = dma.done %s23, %s38
        %v40 = vld [vmem:[#allocation9] sm:$0xf]
        %v41 = vld [vmem:[#allocation10] sm:$0xf]
        %v42 = vmul.f32 %v40, %v40
        %vm43 = vcmask 257024
        %v44 = vsel %vm43, %v42, 0.0
        %45 = vadd.xlane.f32.xlu0 %v44
        %v46 = vpop.xlane.xlu0 %45
        %v47 = vmax.f32 %v46, 1e-24
        %v48 = vrsqrt.pop %v47
        %v49 = vmul.f32 %v48, 1.4142135
        %v50 = vmul.f32 %v41, %v41
        %v51 = vsel %vm43, %v50, 0.0
        %52 = vadd.xlane.f32.xlu0 %v51
        %v53 = vpop.xlane.xlu0 %52
        %v54 = vmax.f32 %v53, 1e-24
        %v55 = vrsqrt.pop %v54
        %v56 = vmul.f32 %v55, 1.4142135
        %v57 = vmul.f32 %v40, %v49
        %v58 = vmul.f32 %v41, %v56
        %v59 = vmul.f32 %v57, %v58
        %v60 = vsel %vm43, %v59, 0.0
        %61 = vadd.xlane.f32.xlu0 %v60
        %v62 = vpop.xlane.xlu0 %61
        %v63 = vrot.slane %v62, 4
        %v64 = vadd.f32 %v62, %v63
        %v65 = vrot.slane %v64, 2
        %v66 = vadd.f32 %v64, %v65
        %v67 = vrot.slane %v66, 1
        %v68 = vadd.f32 %v66, %v67
        %s69 = vtos %v68
        %v70 = vstv %s69
        %vm71 = vcmask 0
        %72 = vst.msk [vmem:[#allocation6] sm:$0x1] %vm71, %v70
        %73 = vst.msk [vmem:[#allocation2] sm:$0xf] %vm43, %v57
        %74 = vst.msk [vmem:[#allocation3] sm:$0xf] %vm43, %v58
      %vm75 = vcmask 3072
      %76 = vst.msk [vmem:[#allocation4] sm:$0xf] %vm75, 0.0
      %vm77 = vcmask 0
      %78 = vst.msk [vmem:[#allocation5] sm:$0x1] %vm77, 0.0
    $region5: #{tpu_custom_call.1} parent=1 // pred_fallthru
      _
    %v79 = vld [vmem:[#allocation2] sm:$0xf]
    %v80 = vld [vmem:[#allocation3] sm:$0xf]
    %s81 = smul.u32 0, 4
    %s82 = scalar_lea.vmem [#allocation2], %s81
    %v83 = vld [vmem:[%s82] sm:$0xf]
    %s84 = scalar_lea.vmem [#allocation3], %s81
    %v85 = vld [vmem:[%s84] sm:$0xf]
    %vm86 = vcmask 261120
    %v88 = vsel %vm86, %v79, 0
    %v91 = vsel %vm86, %v83, 0
    %93 = vmatprep.subr.mxu0 0.0
    %94 = vmatpush1.xpose.msra.mxu0 0.0
    %95 = vmatprep.subr.mxu0 0.0
    %96 = vmatpush1.xpose.msra.mxu0 0.0
    %97 = vmatprep.subr.mxu0 0.0
    %98 = vmatpush1.xpose.msra.mxu0 0.0
    %99 = vmatprep.subr.mxu0 0.0
    %100 = vmatpush1.xpose.msra.mxu0 0.0
    %101 = vmatprep.subr.mxu0 0.0
    %102 = vmatpush1.xpose.msra.mxu0 0.0
    %103 = vmatprep.subr.mxu0 0.0
    %104 = vmatpush1.xpose.msra.mxu0 0.0
    %105 = vmatprep.subr.mxu0 0.0
    %106 = vmatpush1.xpose.msra.mxu0 0.0
    %107 = vmatprep.subr.mxu0 0.0
    %108 = vmatpush1.xpose.msra.mxu0 0.0
    %109 = vmatprep.subr.mxu0 0.0
    %110 = vmatpush1.xpose.msra.mxu0 0.0
    %111 = vmatprep.subr.mxu0 0.0
    %112 = vmatpush1.xpose.msra.mxu0 0.0
    %113 = vmatprep.subr.mxu0 0.0
    %114 = vmatpush1.xpose.msra.mxu0 0.0
    %115 = vmatprep.subr.mxu0 0.0
    %116 = vmatpush1.xpose.msra.mxu0 0.0
    %117 = vmatprep.subr.mxu0 0.0
    %118 = vmatpush1.xpose.msra.mxu0 0.0
    %119 = vmatprep.subr.mxu0 0.0
    %120 = vmatpush1.xpose.msra.mxu0 0.0
    %121 = vmatprep.subr.mxu0 0.0
    %122 = vmatpush1.xpose.msra.mxu0 0.0
    %123 = vmatprep.subr.mxu0 0.0
    %124 = vmatpush1.xpose.msra.mxu0 %v91
    %125 = vmatprep.subr.mxu0 0.0
    %126 = vmatpush2.xpose.msra.mxu0 0.0
    %127 = vmatprep.subr.mxu0 0.0
    %128 = vmatpush2.xpose.msra.mxu0 0.0
    %129 = vmatprep.subr.mxu0 0.0
    %130 = vmatpush2.xpose.msra.mxu0 0.0
    %131 = vmatprep.subr.mxu0 0.0
    %132 = vmatpush2.xpose.msra.mxu0 0.0
    %133 = vmatprep.subr.mxu0 0.0
    %134 = vmatpush2.xpose.msra.mxu0 0.0
    %135 = vmatprep.subr.mxu0 0.0
    %136 = vmatpush2.xpose.msra.mxu0 0.0
    %137 = vmatprep.subr.mxu0 0.0
    %138 = vmatpush2.xpose.msra.mxu0 0.0
    %139 = vmatprep.subr.mxu0 0.0
    %140 = vmatpush2.xpose.msra.mxu0 0.0
    %141 = vmatprep.subr.mxu0 0.0
    %142 = vmatpush2.xpose.msra.mxu0 0.0
    %143 = vmatprep.subr.mxu0 0.0
    %144 = vmatpush2.xpose.msra.mxu0 0.0
    %145 = vmatprep.subr.mxu0 0.0
    %146 = vmatpush2.xpose.msra.mxu0 0.0
    %147 = vmatprep.subr.mxu0 0.0
    %148 = vmatpush2.xpose.msra.mxu0 0.0
    %149 = vmatprep.subr.mxu0 0.0
    %150 = vmatpush2.xpose.msra.mxu0 0.0
    %151 = vmatprep.subr.mxu0 0.0
    %152 = vmatpush2.xpose.msra.mxu0 0.0
    %153 = vmatprep.subr.mxu0 0.0
    %154 = vmatpush2.xpose.msra.mxu0 0.0
    %155 = vmatprep.subr.mxu0 0.0
    %156 = vmatpush2.xpose.msra.mxu0 0.0
    %157 = vmatprep.mubr.f32.mxu0 0.0
    %158 = vmatmul.mubr.f32.gmra.mxu0 %v88
    %v159 = vpop.f32.mrf.mxu0
    %v160 = vadd.f32 0.0, %v159
    %v161 = vpop.f32.mrf.mxu0
    %162 = vdwg.mxu0
    %v164 = vsel %vm86, %v85, 0
    %166 = vmatprep.subr.mxu0 0.0
    %167 = vmatpush1.xpose.msra.mxu0 0.0
    %168 = vmatprep.subr.mxu0 0.0
    %169 = vmatpush1.xpose.msra.mxu0 0.0
    %170 = vmatprep.subr.mxu0 0.0
    %171 = vmatpush1.xpose.msra.mxu0 0.0
    %172 = vmatprep.subr.mxu0 0.0
    %173 = vmatpush1.xpose.msra.mxu0 0.0
    %174 = vmatprep.subr.mxu0 0.0
    %175 = vmatpush1.xpose.msra.mxu0 0.0
    %176 = vmatprep.subr.mxu0 0.0
    %177 = vmatpush1.xpose.msra.mxu0 0.0
    %178 = vmatprep.subr.mxu0 0.0
    %179 = vmatpush1.xpose.msra.mxu0 0.0
    %180 = vmatprep.subr.mxu0 0.0
    %181 = vmatpush1.xpose.msra.mxu0 0.0
    %182 = vmatprep.subr.mxu0 0.0
    %183 = vmatpush1.xpose.msra.mxu0 0.0
    %184 = vmatprep.subr.mxu0 0.0
    %185 = vmatpush1.xpose.msra.mxu0 0.0
    %186 = vmatprep.subr.mxu0 0.0
    %187 = vmatpush1.xpose.msra.mxu0 0.0
    %188 = vmatprep.subr.mxu0 0.0
    %189 = vmatpush1.xpose.msra.mxu0 0.0
    %190 = vmatprep.subr.mxu0 0.0
    %191 = vmatpush1.xpose.msra.mxu0 0.0
    %192 = vmatprep.subr.mxu0 0.0
    %193 = vmatpush1.xpose.msra.mxu0 0.0
    %194 = vmatprep.subr.mxu0 0.0
    %195 = vmatpush1.xpose.msra.mxu0 0.0
    %196 = vmatprep.subr.mxu0 0.0
    %197 = vmatpush1.xpose.msra.mxu0 %v164
    %198 = vmatprep.subr.mxu0 0.0
    %199 = vmatpush2.xpose.msra.mxu0 0.0
    %200 = vmatprep.subr.mxu0 0.0
    %201 = vmatpush2.xpose.msra.mxu0 0.0
    %202 = vmatprep.subr.mxu0 0.0
    %203 = vmatpush2.xpose.msra.mxu0 0.0
    %204 = vmatprep.subr.mxu0 0.0
    %205 = vmatpush2.xpose.msra.mxu0 0.0
    %206 = vmatprep.subr.mxu0 0.0
    %207 = vmatpush2.xpose.msra.mxu0 0.0
    %208 = vmatprep.subr.mxu0 0.0
    %209 = vmatpush2.xpose.msra.mxu0 0.0
    %210 = vmatprep.subr.mxu0 0.0
    %211 = vmatpush2.xpose.msra.mxu0 0.0
    %212 = vmatprep.subr.mxu0 0.0
    %213 = vmatpush2.xpose.msra.mxu0 0.0
    %214 = vmatprep.subr.mxu0 0.0
    %215 = vmatpush2.xpose.msra.mxu0 0.0
    %216 = vmatprep.subr.mxu0 0.0
    %217 = vmatpush2.xpose.msra.mxu0 0.0
    %218 = vmatprep.subr.mxu0 0.0
    %219 = vmatpush2.xpose.msra.mxu0 0.0
    %220 = vmatprep.subr.mxu0 0.0
    %221 = vmatpush2.xpose.msra.mxu0 0.0
    %222 = vmatprep.subr.mxu0 0.0
    %223 = vmatpush2.xpose.msra.mxu0 0.0
    %224 = vmatprep.subr.mxu0 0.0
    %225 = vmatpush2.xpose.msra.mxu0 0.0
    %226 = vmatprep.subr.mxu0 0.0
    %227 = vmatpush2.xpose.msra.mxu0 0.0
    %228 = vmatprep.subr.mxu0 0.0
    %229 = vmatpush2.xpose.msra.mxu0 0.0
    %230 = vmatprep.mubr.f32.mxu0 0.0
    %231 = vmatmul.mubr.f32.gmra.mxu0 %v88
    %v232 = vpop.f32.mrf.mxu0
    %v233 = vadd.f32 0.0, %v232
    %v234 = vpop.f32.mrf.mxu0
    %235 = vdwg.mxu0
    %v237 = vsel %vm86, %v80, 0
    %239 = vmatprep.subr.mxu0 0.0
    %240 = vmatpush1.xpose.msra.mxu0 0.0
    %241 = vmatprep.subr.mxu0 0.0
    %242 = vmatpush1.xpose.msra.mxu0 0.0
    %243 = vmatprep.subr.mxu0 0.0
    %244 = vmatpush1.xpose.msra.mxu0 0.0
    %245 = vmatprep.subr.mxu0 0.0
    %246 = vmatpush1.xpose.msra.mxu0 0.0
    %247 = vmatprep.subr.mxu0 0.0
    %248 = vmatpush1.xpose.msra.mxu0 0.0
    %249 = vmatprep.subr.mxu0 0.0
    %250 = vmatpush1.xpose.msra.mxu0 0.0
    %251 = vmatprep.subr.mxu0 0.0
    %252 = vmatpush1.xpose.msra.mxu0 0.0
    %253 = vmatprep.subr.mxu0 0.0
    %254 = vmatpush1.xpose.msra.mxu0 0.0
    %255 = vmatprep.subr.mxu0 0.0
    %256 = vmatpush1.xpose.msra.mxu0 0.0
    %257 = vmatprep.subr.mxu0 0.0
    %258 = vmatpush1.xpose.msra.mxu0 0.0
    %259 = vmatprep.subr.mxu0 0.0
    %260 = vmatpush1.xpose.msra.mxu0 0.0
    %261 = vmatprep.subr.mxu0 0.0
    %262 = vmatpush1.xpose.msra.mxu0 0.0
    %263 = vmatprep.subr.mxu0 0.0
    %264 = vmatpush1.xpose.msra.mxu0 0.0
    %265 = vmatprep.subr.mxu0 0.0
    %266 = vmatpush1.xpose.msra.mxu0 0.0
    %267 = vmatprep.subr.mxu0 0.0
    %268 = vmatpush1.xpose.msra.mxu0 0.0
    %269 = vmatprep.subr.mxu0 0.0
    %270 = vmatpush1.xpose.msra.mxu0 %v164
    %271 = vmatprep.subr.mxu0 0.0
    %272 = vmatpush2.xpose.msra.mxu0 0.0
    %273 = vmatprep.subr.mxu0 0.0
    %274 = vmatpush2.xpose.msra.mxu0 0.0
    %275 = vmatprep.subr.mxu0 0.0
    %276 = vmatpush2.xpose.msra.mxu0 0.0
    %277 = vmatprep.subr.mxu0 0.0
    %278 = vmatpush2.xpose.msra.mxu0 0.0
    %279 = vmatprep.subr.mxu0 0.0
    %280 = vmatpush2.xpose.msra.mxu0 0.0
    %281 = vmatprep.subr.mxu0 0.0
    %282 = vmatpush2.xpose.msra.mxu0 0.0
    %283 = vmatprep.subr.mxu0 0.0
    %284 = vmatpush2.xpose.msra.mxu0 0.0
    %285 = vmatprep.subr.mxu0 0.0
    %286 = vmatpush2.xpose.msra.mxu0 0.0
    %287 = vmatprep.subr.mxu0 0.0
    %288 = vmatpush2.xpose.msra.mxu0 0.0
    %289 = vmatprep.subr.mxu0 0.0
    %290 = vmatpush2.xpose.msra.mxu0 0.0
    %291 = vmatprep.subr.mxu0 0.0
    %292 = vmatpush2.xpose.msra.mxu0 0.0
    %293 = vmatprep.subr.mxu0 0.0
    %294 = vmatpush2.xpose.msra.mxu0 0.0
    %295 = vmatprep.subr.mxu0 0.0
    %296 = vmatpush2.xpose.msra.mxu0 0.0
    %297 = vmatprep.subr.mxu0 0.0
    %298 = vmatpush2.xpose.msra.mxu0 0.0
    %299 = vmatprep.subr.mxu0 0.0
    %300 = vmatpush2.xpose.msra.mxu0 0.0
    %301 = vmatprep.subr.mxu0 0.0
    %302 = vmatpush2.xpose.msra.mxu0 0.0
    %303 = vmatprep.mubr.f32.mxu0 0.0
    %304 = vmatmul.mubr.f32.gmra.mxu0 %v237
    %v305 = vpop.f32.mrf.mxu0
    %v306 = vadd.f32 0.0, %v305
    %v307 = vpop.f32.mrf.mxu0
    %308 = vdwg.mxu0
    %v309 = vmul.f32 %v160, 1.442695
    %v310 = vpow.pop %v309
    %v311 = vmul.f32 %v233, 1.442695
    %v312 = vpow.pop %v311
    %v313 = vmul.f32 %v306, 1.442695
    %v314 = vpow.pop %v313
    %v315 = vld [vmem:[#allocation4] sm:$0xf]
    %v316 = vadd.f32 %v310, %v312
    %vm317 = vcmask 27648
    %v318 = vsel %vm317, %v316, 0.0
    %319 = vadd.xlane.f32.xlu0 %v318
    %v320 = vpop.xlane.xlu0 %319
    %v321 = vadd.f32 %v315, %v320
    %vm322 = vcmask 3072
    %323 = vst.msk [vmem:[#allocation4] sm:$0xf] %vm322, %v321
    %v324 = vadd.f32 %v312, %v314
    %v325 = vsel %vm317, %v324, 0.0
    %v326 = vrot.slane %v325, 4
    %v327 = vadd.f32 %v325, %v326
    %v328 = vrot.slane %v327, 2
    %v329 = vadd.f32 %v327, %v328
    %v330 = vrot.slane %v329, 1
    %v331 = vadd.f32 %v329, %v330
    %v332 = vsub.f32 %v331, 7.3890557
    %v333 = vld [vmem:[#allocation5] sm:$0x1]
    %v334 = vlog2.pop %v332
    %v335 = vmul.f32 %v334, 0.6931472
    %vm336 = vcmask 24576
    %v337 = vsel %vm336, %v335, 0.0
    %338 = vadd.xlane.f32.xlu0 %v337
    %v339 = vpop.xlane.xlu0 %338
    %v340 = vrot.slane %v339, 4
    %v341 = vadd.f32 %v339, %v340
    %v342 = vrot.slane %v341, 2
    %v343 = vadd.f32 %v341, %v342
    %v344 = vrot.slane %v343, 1
    %v345 = vadd.f32 %v343, %v344
    %s346 = vtos %v345
    %v347 = vstv %s346
    %v348 = vadd.f32 %v333, %v347
    %vm349 = vcmask 0
    %350 = vst.msk [vmem:[#allocation5] sm:$0x1] %vm349, %v348
    // Predicated region
    $region15: #{tpu_custom_call.1} parent=1 // pred_check
      %p351 = pneg %p8
    $region16: #{tpu_custom_call.1} parent=1 // pred_check_branch
      %353 = sbr.rel (%p351) target = $region18
    $region17: #{tpu_custom_call.1} parent=1 // pred_region
      %v354 = vld [vmem:[#allocation4] sm:$0xf]
      %v355 = vsub.f32 %v354, 7.3890557
      %v356 = vlog2.pop %v355
      %v357 = vmul.f32 %v356, 0.6931472
      %v358 = vsel %vm322, %v357, 0.0
      %359 = vadd.xlane.f32.xlu0 %v358
      %v360 = vpop.xlane.xlu0 %359
      %v361 = vrot.slane %v360, 4
      %v362 = vadd.f32 %v360, %v361
      %v363 = vrot.slane %v362, 2
      %v364 = vadd.f32 %v362, %v363
      %v365 = vrot.slane %v364, 1
      %v366 = vadd.f32 %v364, %v365
      %s367 = vtos %v366
      %v368 = vld [vmem:[#allocation5] sm:$0x1]
      %v369 = vstv %s367
      %v370 = vadd.f32 %v369, %v368
      %v371 = vld [vmem:[#allocation6] sm:$0x1]
      %v372 = vmul.f32 %v371, 2.0
      %v373 = vsub.f32 %v370, %v372
      %v374 = vmul.f32 %v373, 0.125
      %375 = vst.msk [vmem:[#allocation7] sm:$0x1] %vm349, %v374
    $region18: #{tpu_custom_call.1} parent=1 // pred_fallthru
      _
    // Predicated region
    $region19: #{tpu_custom_call.1} parent=1 // pred_check
      _
    $region20: #{tpu_custom_call.1} parent=1 // pred_check_branch
      %377 = sbr.rel (0) target = $region22
    $region21: #{tpu_custom_call.1} parent=1 // pred_region
      %s379 = ssub.s32 16, 16
      %380 = vsyncadd [#allocation8], %s379
      %s382 = sshll.u32 [#allocation7], 4
      %s383 = int_to_ptr.vmem [resolvable:$true] %s382
      %385 = dma.vmem_to_hbm [thread:$0]  %s383, 16, %s2, [#allocation8]
    $region22: #{tpu_custom_call.1} parent=1 // pred_fallthru
      _
    // Predicated region
    $region23: #{tpu_custom_call.1} parent=1 // pred_check
      _
    $region24: #{tpu_custom_call.1} parent=1 // pred_check_branch
      %387 = sbr.rel (0) target = $region26
    $region25: #{tpu_custom_call.1} parent=1 // pred_region
      %388 = dma.done [#allocation8], 16
    $region26: #{tpu_custom_call.1} parent=1 // pred_fallthru
      _
    %389 = vsyncpa [#allocation8], 1

</llo_original>
